<compile_context>
chip_gen: v5e
topology: v5e:2x2
jax: 0.10.0
libtpu: 0.0.40
codegen_flags: <defaults>
</compile_context>

<pallas_src>
import functools

import jax
import jax.numpy as jnp
from jax.experimental import pallas as pl
from jax.experimental.pallas import tpu as pltpu


def _fold_lanes(x, width):
    """Reduce (C, W) -> (C, width) by summing lane-aligned chunks.

    W must be a multiple of `width` (or equal to it).  All slices are at
    multiples of 128 lanes, so this is pure vreg adds (no XLU relayout).
    """
    w = x.shape[1]
    carry = None
    while w > width:
        n = w // width
        if n % 2 == 1:                       # peel one chunk so the rest halves
            tail = x[:, (n - 1) * width:]
            carry = tail if carry is None else carry + tail
            w = (n - 1) * width
            x = x[:, :w]
        half = w // 2
        x = x[:, :half] + x[:, half:]
        w = half
    return x if carry is None else x + carry


def _tversky_sums_kernel(logits_ref, target_ref, a_ref, b_ref, d_ref, *,
                         ignore_index, hw, tiles_per_core, needs_mask):
    n = pl.program_id(1)
    i = pl.program_id(2)

    @pl.when((n == 0) & (i == 0))
    def _init():                              # first tile of each core's range
        a_ref[...] = jnp.zeros_like(a_ref)
        b_ref[...] = jnp.zeros_like(b_ref)
        d_ref[...] = jnp.zeros_like(d_ref)

    logits = logits_ref[...].astype(jnp.float32)            # (C, TP)
    tgt = target_ref[...].astype(jnp.int32)                 # (1, TP)
    C, TP = logits.shape
    acc_w = a_ref.shape[-1]

    if needs_mask:
        # Ragged last tile and/or duplicated (clamped) tiles from the per-core
        # split: mask lanes past `hw` and zero their logits before exp so
        # garbage cannot poison the sums.  Only compiled in when needed.
        core = pl.program_id(0)
        g = core * tiles_per_core + i                        # un-clamped tile idx
        lane = jax.lax.broadcasted_iota(jnp.int32, (1, TP), 1)
        in_bounds = (g * TP + lane) < hw                     # (1, TP)
        valid = in_bounds & (tgt != ignore_index)
        logits = jnp.where(in_bounds, logits, 0.0)
    else:
        valid = tgt != ignore_index                          # (1, TP)

    validf = valid.astype(jnp.float32)                       # (1, TP)

    # Per-pixel softmax over the class (sublane) axis; the reciprocal is a
    # per-lane op so exact (non-approx) is effectively free, and the validity
    # mask is folded into it so no extra (C,TP) mul is needed.
    m = jnp.max(logits, axis=0, keepdims=True)               # (1, TP)
    e = jnp.exp(logits - m)                                  # (C, TP)
    denom = jnp.sum(e, axis=0, keepdims=True)                # (1, TP)
    recip_v = pl.reciprocal(denom) * validf                  # (1, TP)
    probs_m = e * recip_v                                    # valid * softmax

    class_col = jax.lax.broadcasted_iota(jnp.int32, (C, 1), 0)
    is_c = tgt == class_col                                  # (C, TP) one-hot mask

    # Three per-class partial sums, kept lane-dense at width acc_w; the final
    # cross-lane reduce (and fp/fn derivation) happens in the wrapper.
    a_ref[...] += _fold_lanes(jnp.where(is_c, probs_m, 0.0), acc_w)   # tp
    b_ref[...] += _fold_lanes(probs_m, acc_w)                         # sum valid*p
    d_ref[...] += _fold_lanes(jnp.where(is_c, validf, 0.0), acc_w)    # sum target_c


def tversky_loss(logits_nchw, target_nhw, *, ignore_index=255, smooth=1.0,
                 alpha=0.5, beta=0.5, max_tile_p=None, num_core_splits=2):
    """logits_nchw: (N, C, H, W) float (f32 or bf16); target_nhw: (N, H, W) int."""
    N, C, H, W = logits_nchw.shape
    HW = H * W

    # Free, contiguous reshapes only — no transpose / pad / astype HBM passes.
    logits = logits_nchw.reshape(N, C, HW)
    if not jnp.issubdtype(target_nhw.dtype, jnp.integer):
        target_nhw = target_nhw.astype(jnp.int32)
    target = target_nhw.reshape(N, 1, HW)     # native int dtype kept (u8/i16/i32)

    # ---- Generation-aware tile sizing --------------------------------------
    try:
        vmem_cap = int(pltpu.get_tpu_info().vmem_capacity_bytes)
    except Exception:                          # pragma: no cover - conservative
        vmem_cap = 64 * 1024 * 1024            # v7x-sized fallback
    vmem_limit = min((vmem_cap * 3) // 4, 96 * 1024 * 1024)

    logit_isz = jnp.dtype(logits.dtype).itemsize
    tgt_isz = jnp.dtype(target.dtype).itemsize
    # Per-lane VMEM: double-buffered inputs + ~8 live (C, TP) f32 temporaries
    # that Mosaic materialises for the softmax / select / fold chain.
    per_lane = 2 * (C * logit_isz + tgt_isz) + 8 * C * 4
    budget = (vmem_limit * 7) // 10
    tile_cap = max(128, min((budget // per_lane), 1 << 19) // 128 * 128)
    if max_tile_p is not None:
        tile_cap = max(128, min(tile_cap, (max_tile_p // 128) * 128))

    if HW < 128:
        tile_p = HW                            # single full-dim block per image
    else:
        tile_p = min(tile_cap, (HW // 128) * 128)

    num_tiles = pl.cdiv(HW, tile_p)
    tpc = pl.cdiv(num_tiles, num_core_splits)  # tiles per core
    needs_mask = (HW % tile_p != 0) or (num_tiles % num_core_splits != 0)
    acc_w = min(128, tile_p)

    def in_map(core, n, i):
        # Clamp duplicated tail tiles of the per-core split to a valid block;
        # their contribution is masked to zero in-kernel.
        g = jnp.minimum(core * tpc + i, num_tiles - 1)
        return (n, 0, g)

    kernel = functools.partial(
        _tversky_sums_kernel, ignore_index=ignore_index, hw=HW,
        tiles_per_core=tpc, needs_mask=needs_mask)

    acc_shape = jax.ShapeDtypeStruct((num_core_splits, C, acc_w), jnp.float32)
    acc_spec = pl.BlockSpec((None, C, acc_w), lambda core, n, i: (core, 0, 0))

    a, b, d = pl.pallas_call(
        kernel,
        out_shape=[acc_shape, acc_shape, acc_shape],
        grid_spec=pltpu.PrefetchScalarGridSpec(
            num_scalar_prefetch=0,
            grid=(num_core_splits, N, tpc),
            in_specs=[
                pl.BlockSpec((None, C, tile_p), in_map),
                pl.BlockSpec((None, 1, tile_p), in_map),
            ],
            out_specs=[acc_spec, acc_spec, acc_spec],
        ),
        compiler_params=pltpu.CompilerParams(
            dimension_semantics=("parallel", "arbitrary", "arbitrary"),
            vmem_limit_bytes=vmem_limit),
    )(logits, target)

    # Final cross-core / cross-lane reduction and Tversky combination (tiny).
    t_p = jnp.sum(a, axis=(0, 2))
    f_p = jnp.sum(b, axis=(0, 2)) - t_p
    f_n = jnp.sum(d, axis=(0, 2)) - t_p
    tversky = (t_p + smooth) / (t_p + alpha * f_p + beta * f_n + smooth)
    return jnp.mean(1.0 - tversky)


def _reference_tversky(logits_nchw, target_nhw, *, ignore_index=255,
                       smooth=1.0, alpha=0.5, beta=0.5):
    """Pure-JAX reference mirroring the PyTorch forward."""
    N, C, H, W = logits_nchw.shape
    x = jnp.transpose(logits_nchw, (0, 2, 3, 1)).reshape(-1, C)
    t = target_nhw.reshape(-1).astype(jnp.int32)
    valid = (t != ignore_index).astype(jnp.float32)
    probs = jax.nn.softmax(x.astype(jnp.float32), axis=1)
    losses = []
    for c in range(C):
        target_c = (t == c).astype(jnp.float32) * valid
        input_c = probs[:, c]
        t_p = jnp.sum(input_c * target_c)
        f_p = jnp.sum((valid - target_c) * input_c)
        f_n = jnp.sum(target_c * (1.0 - input_c))
        tv = (t_p + smooth) / (t_p + alpha * f_p + beta * f_n + smooth)
        losses.append(1.0 - tv)
    return jnp.mean(jnp.stack(losses))


if __name__ == "__main__":
    key = jax.random.PRNGKey(0)
    k_logits, k_target, k_mask = jax.random.split(key, 3)

    # Case 1: lane-aligned spatial size (HW = 256), default (large) tile.
    N, C, H, W = 2, 4, 16, 16
    logits = jax.random.normal(k_logits, (N, C, H, W), dtype=jnp.float32)
    target = jax.random.randint(k_target, (N, H, W), 0, C, dtype=jnp.int32)
    ignore_mask = jax.random.uniform(k_mask, (N, H, W)) < 0.1
    target = jnp.where(ignore_mask, 255, target)

    loss = jax.block_until_ready(tversky_loss(logits, target))
    ref = _reference_tversky(logits, target)
    assert jnp.allclose(loss, ref, atol=1e-3, rtol=1e-3), (loss, ref)

    # Case 2: ragged spatial size (HW = 300) with a small forced tile to
    # exercise the in-kernel boundary mask, the clamped duplicate tile from
    # the 2-way core split, and multi-tile accumulation.
    H2, W2 = 15, 20
    k2a, k2b, k2c = jax.random.split(jax.random.PRNGKey(1), 3)
    logits2 = jax.random.normal(k2a, (N, C, H2, W2), dtype=jnp.float32)
    target2 = jax.random.randint(k2b, (N, H2, W2), 0, C, dtype=jnp.int32)
    target2 = jnp.where(jax.random.uniform(k2c, (N, H2, W2)) < 0.1, 255, target2)

    loss2 = jax.block_until_ready(tversky_loss(logits2, target2, max_tile_p=128))
    ref2 = _reference_tversky(logits2, target2)
    assert jnp.allclose(loss2, ref2, atol=1e-3, rtol=1e-3), (loss2, ref2)

    # Case 3: bf16 logits (accepted as-is, cast to f32 in-kernel), C = 8.
    k3a, k3b, k3c = jax.random.split(jax.random.PRNGKey(2), 3)
    C3, H3, W3 = 8, 16, 24                                  # HW = 384
    logits3 = jax.random.normal(k3a, (N, C3, H3, W3), dtype=jnp.bfloat16)
    target3 = jax.random.randint(k3b, (N, H3, W3), 0, C3, dtype=jnp.int32)
    target3 = jnp.where(jax.random.uniform(k3c, (N, H3, W3)) < 0.1, 255, target3)

    loss3 = jax.block_until_ready(tversky_loss(logits3, target3))
    ref3 = _reference_tversky(logits3, target3)
    assert jnp.allclose(loss3, ref3, atol=1e-3, rtol=1e-3), (loss3, ref3)

    print("KERNEL_OK")
</pallas_src>

<mosaic_0001>
module attributes {stable_mosaic.version = 11 : i64} {
  func.func @_tversky_sums_kernel(%arg0: i32, %arg1: i32, %arg2: i32, %arg3: memref<1x4x256xf32, #tpu.memory_space<vmem>>, %arg4: memref<1x1x256xi32, #tpu.memory_space<vmem>>, %arg5: memref<1x4x128xf32, #tpu.memory_space<vmem>>, %arg6: memref<1x4x128xf32, #tpu.memory_space<vmem>>, %arg7: memref<1x4x128xf32, #tpu.memory_space<vmem>>) attributes {dimension_semantics = [#tpu.dimension_semantics<parallel>, #tpu.dimension_semantics<arbitrary>, #tpu.dimension_semantics<arbitrary>], iteration_bounds = array<i64: 2, 2, 1>, scalar_prefetch = 0 : i64, scratch_operands = 0 : i64, tpu.core_type = #tpu.core_type<tc>, window_params = [{transform_indices = @transform_0, window_bounds = array<i64: 1, 4, 256>}, {transform_indices = @transform_1, window_bounds = array<i64: 1, 1, 256>}, {transform_indices = @transform_2, window_bounds = array<i64: 1, 4, 128>}, {transform_indices = @transform_3, window_bounds = array<i64: 1, 4, 128>}, {transform_indices = @transform_4, window_bounds = array<i64: 1, 4, 128>}]} {
    %c0_i32 = arith.constant 0 : i32
    %0 = arith.cmpi eq, %arg1, %c0_i32 : i32
    %c0_i32_0 = arith.constant 0 : i32
    %1 = arith.cmpi eq, %arg2, %c0_i32_0 : i32
    %2 = arith.andi %0, %1 : i1
    %3 = arith.extui %2 : i1 to i32
    %c0_i32_1 = arith.constant 0 : i32
    %4 = arith.cmpi ne, %3, %c0_i32_1 : i32
    scf.if %4 {
      %cst_30 = arith.constant 0.000000e+00 : f32
      %74 = vector.broadcast %cst_30 : f32 to vector<4x128xf32>
      %c0_31 = arith.constant 0 : index
      %c0_32 = arith.constant 0 : index
      %c0_33 = arith.constant 0 : index
      %75 = vector.load %arg5[%c0_31, %c0_32, %c0_33] : memref<1x4x128xf32, #tpu.memory_space<vmem>>, vector<1x4x128xf32>
      %76 = vector.shape_cast %75 : vector<1x4x128xf32> to vector<4x128xf32>
      %77 = vector.shape_cast %74 : vector<4x128xf32> to vector<1x4x128xf32>
      tpu.vector_store %arg5[%c0_31, %c0_32, %c0_33], %77 {strides = array<i32>} : memref<1x4x128xf32, #tpu.memory_space<vmem>>, vector<1x4x128xf32>,
      %cst_34 = arith.constant 0.000000e+00 : f32
      %78 = vector.broadcast %cst_34 : f32 to vector<4x128xf32>
      %c0_35 = arith.constant 0 : index
      %c0_36 = arith.constant 0 : index
      %c0_37 = arith.constant 0 : index
      %79 = vector.load %arg6[%c0_35, %c0_36, %c0_37] : memref<1x4x128xf32, #tpu.memory_space<vmem>>, vector<1x4x128xf32>
      %80 = vector.shape_cast %79 : vector<1x4x128xf32> to vector<4x128xf32>
      %81 = vector.shape_cast %78 : vector<4x128xf32> to vector<1x4x128xf32>
      tpu.vector_store %arg6[%c0_35, %c0_36, %c0_37], %81 {strides = array<i32>} : memref<1x4x128xf32, #tpu.memory_space<vmem>>, vector<1x4x128xf32>,
      %cst_38 = arith.constant 0.000000e+00 : f32
      %82 = vector.broadcast %cst_38 : f32 to vector<4x128xf32>
      %c0_39 = arith.constant 0 : index
      %c0_40 = arith.constant 0 : index
      %c0_41 = arith.constant 0 : index
      %83 = vector.load %arg7[%c0_39, %c0_40, %c0_41] : memref<1x4x128xf32, #tpu.memory_space<vmem>>, vector<1x4x128xf32>
      %84 = vector.shape_cast %83 : vector<1x4x128xf32> to vector<4x128xf32>
      %85 = vector.shape_cast %82 : vector<4x128xf32> to vector<1x4x128xf32>
      tpu.vector_store %arg7[%c0_39, %c0_40, %c0_41], %85 {strides = array<i32>} : memref<1x4x128xf32, #tpu.memory_space<vmem>>, vector<1x4x128xf32>,
    } else {
    }
    %c0 = arith.constant 0 : index
    %c0_2 = arith.constant 0 : index
    %c0_3 = arith.constant 0 : index
    %5 = vector.load %arg3[%c0, %c0_2, %c0_3] : memref<1x4x256xf32, #tpu.memory_space<vmem>>, vector<1x4x256xf32>
    %6 = vector.shape_cast %5 : vector<1x4x256xf32> to vector<4x256xf32>
    %c0_4 = arith.constant 0 : index
    %c0_5 = arith.constant 0 : index
    %c0_6 = arith.constant 0 : index
    %7 = vector.load %arg4[%c0_4, %c0_5, %c0_6] : memref<1x1x256xi32, #tpu.memory_space<vmem>>, vector<1x1x256xi32>
    %8 = vector.shape_cast %7 : vector<1x1x256xi32> to vector<1x256xi32>
    %c1_i32 = arith.constant 1 : i32
    %9 = arith.muli %arg0, %c1_i32 : i32
    %10 = arith.addi %9, %arg2 : i32
    %11 = tpu.iota {dimensions = array<i32: 1>} : vector<1x256xi32>
    %c256_i32 = arith.constant 256 : i32
    %12 = arith.muli %10, %c256_i32 : i32
    %13 = vector.broadcast %12 : i32 to vector<1x256xi32>
    %14 = arith.addi %13, %11 : vector<1x256xi32>
    %c256_i32_7 = arith.constant 256 : i32
    %15 = vector.broadcast %c256_i32_7 : i32 to vector<1x256xi32>
    %16 = arith.cmpi slt, %14, %15 : vector<1x256xi32>
    %c255_i32 = arith.constant 255 : i32
    %17 = vector.broadcast %c255_i32 : i32 to vector<1x256xi32>
    %18 = arith.cmpi ne, %8, %17 : vector<1x256xi32>
    %19 = arith.andi %16, %18 : vector<1x256xi1>
    %cst = arith.constant 0.000000e+00 : f32
    %20 = vector.shape_cast %16 : vector<1x256xi1> to vector<1x256xi1>
    %21 = vector.broadcast %20 : vector<1x256xi1> to vector<4x256xi1>
    %22 = vector.broadcast %cst : f32 to vector<4x256xf32>
    %23 = arith.select %21, %6, %22 : vector<4x256xi1>, vector<4x256xf32>
    %24 = arith.extui %19 : vector<1x256xi1> to vector<1x256xi32>
    %25 = arith.sitofp %24 : vector<1x256xi32> to vector<1x256xf32>
    %cst_8 = arith.constant dense<0xFF800000> : vector<256xf32>
    %26 = vector.multi_reduction <maximumf>, %23, %cst_8 [0] : vector<4x256xf32> to vector<256xf32>
    %27 = vector.shape_cast %26 : vector<256xf32> to vector<1x256xf32>
    %28 = vector.broadcast %27 : vector<1x256xf32> to vector<4x256xf32>
    %29 = arith.subf %23, %28 : vector<4x256xf32>
    %30 = math.exp %29 : vector<4x256xf32>
    %cst_9 = arith.constant dense<0.000000e+00> : vector<256xf32>
    %31 = vector.multi_reduction <add>, %30, %cst_9 [0] : vector<4x256xf32> to vector<256xf32>
    %32 = vector.shape_cast %31 : vector<256xf32> to vector<1x256xf32>
    %33 = tpu.reciprocal %32 : vector<1x256xf32> -> vector<1x256xf32>
    %34 = arith.mulf %33, %25 : vector<1x256xf32>
    %35 = vector.broadcast %34 : vector<1x256xf32> to vector<4x256xf32>
    %36 = arith.mulf %30, %35 : vector<4x256xf32>
    %37 = tpu.iota {dimensions = array<i32: 0>} : vector<4x1xi32>
    %38 = vector.broadcast %8 : vector<1x256xi32> to vector<4x256xi32>
    %39 = vector.broadcast %37 : vector<4x1xi32> to vector<4x256xi32>
    %40 = arith.cmpi eq, %38, %39 : vector<4x256xi32>
    %c0_10 = arith.constant 0 : index
    %c0_11 = arith.constant 0 : index
    %c0_12 = arith.constant 0 : index
    %41 = vector.load %arg5[%c0_10, %c0_11, %c0_12] : memref<1x4x128xf32, #tpu.memory_space<vmem>>, vector<1x4x128xf32>
    %42 = vector.shape_cast %41 : vector<1x4x128xf32> to vector<4x128xf32>
    %cst_13 = arith.constant 0.000000e+00 : f32
    %43 = vector.broadcast %cst_13 : f32 to vector<4x256xf32>
    %44 = arith.select %40, %36, %43 : vector<4x256xi1>, vector<4x256xf32>
    %45 = vector.extract_strided_slice %44 {offsets = [0, 0], sizes = [4, 128], strides = [1, 1]} : vector<4x256xf32> to vector<4x128xf32>
    %46 = vector.extract_strided_slice %44 {offsets = [0, 128], sizes = [4, 128], strides = [1, 1]} : vector<4x256xf32> to vector<4x128xf32>
    %47 = arith.addf %45, %46 : vector<4x128xf32>
    %48 = arith.addf %42, %47 : vector<4x128xf32>
    %c0_14 = arith.constant 0 : index
    %c0_15 = arith.constant 0 : index
    %c0_16 = arith.constant 0 : index
    %49 = vector.load %arg5[%c0_14, %c0_15, %c0_16] : memref<1x4x128xf32, #tpu.memory_space<vmem>>, vector<1x4x128xf32>
    %50 = vector.shape_cast %49 : vector<1x4x128xf32> to vector<4x128xf32>
    %51 = vector.shape_cast %48 : vector<4x128xf32> to vector<1x4x128xf32>
    tpu.vector_store %arg5[%c0_14, %c0_15, %c0_16], %51 {strides = array<i32>} : memref<1x4x128xf32, #tpu.memory_space<vmem>>, vector<1x4x128xf32>,
    %c0_17 = arith.constant 0 : index
    %c0_18 = arith.constant 0 : index
    %c0_19 = arith.constant 0 : index
    %52 = vector.load %arg6[%c0_17, %c0_18, %c0_19] : memref<1x4x128xf32, #tpu.memory_space<vmem>>, vector<1x4x128xf32>
    %53 = vector.shape_cast %52 : vector<1x4x128xf32> to vector<4x128xf32>
    %54 = vector.extract_strided_slice %36 {offsets = [0, 0], sizes = [4, 128], strides = [1, 1]} : vector<4x256xf32> to vector<4x128xf32>
    %55 = vector.extract_strided_slice %36 {offsets = [0, 128], sizes = [4, 128], strides = [1, 1]} : vector<4x256xf32> to vector<4x128xf32>
    %56 = arith.addf %54, %55 : vector<4x128xf32>
    %57 = arith.addf %53, %56 : vector<4x128xf32>
    %c0_20 = arith.constant 0 : index
    %c0_21 = arith.constant 0 : index
    %c0_22 = arith.constant 0 : index
    %58 = vector.load %arg6[%c0_20, %c0_21, %c0_22] : memref<1x4x128xf32, #tpu.memory_space<vmem>>, vector<1x4x128xf32>
    %59 = vector.shape_cast %58 : vector<1x4x128xf32> to vector<4x128xf32>
    %60 = vector.shape_cast %57 : vector<4x128xf32> to vector<1x4x128xf32>
    tpu.vector_store %arg6[%c0_20, %c0_21, %c0_22], %60 {strides = array<i32>} : memref<1x4x128xf32, #tpu.memory_space<vmem>>, vector<1x4x128xf32>,
    %c0_23 = arith.constant 0 : index
    %c0_24 = arith.constant 0 : index
    %c0_25 = arith.constant 0 : index
    %61 = vector.load %arg7[%c0_23, %c0_24, %c0_25] : memref<1x4x128xf32, #tpu.memory_space<vmem>>, vector<1x4x128xf32>
    %62 = vector.shape_cast %61 : vector<1x4x128xf32> to vector<4x128xf32>
    %cst_26 = arith.constant 0.000000e+00 : f32
    %63 = vector.shape_cast %25 : vector<1x256xf32> to vector<1x256xf32>
    %64 = vector.broadcast %63 : vector<1x256xf32> to vector<4x256xf32>
    %65 = vector.broadcast %cst_26 : f32 to vector<4x256xf32>
    %66 = arith.select %40, %64, %65 : vector<4x256xi1>, vector<4x256xf32>
    %67 = vector.extract_strided_slice %66 {offsets = [0, 0], sizes = [4, 128], strides = [1, 1]} : vector<4x256xf32> to vector<4x128xf32>
    %68 = vector.extract_strided_slice %66 {offsets = [0, 128], sizes = [4, 128], strides = [1, 1]} : vector<4x256xf32> to vector<4x128xf32>
    %69 = arith.addf %67, %68 : vector<4x128xf32>
    %70 = arith.addf %62, %69 : vector<4x128xf32>
    %c0_27 = arith.constant 0 : index
    %c0_28 = arith.constant 0 : index
    %c0_29 = arith.constant 0 : index
    %71 = vector.load %arg7[%c0_27, %c0_28, %c0_29] : memref<1x4x128xf32, #tpu.memory_space<vmem>>, vector<1x4x128xf32>
    %72 = vector.shape_cast %71 : vector<1x4x128xf32> to vector<4x128xf32>
    %73 = vector.shape_cast %70 : vector<4x128xf32> to vector<1x4x128xf32>
    tpu.vector_store %arg7[%c0_27, %c0_28, %c0_29], %73 {strides = array<i32>} : memref<1x4x128xf32, #tpu.memory_space<vmem>>, vector<1x4x128xf32>,
    return
  }
  func.func @transform_0(%arg0: i32, %arg1: i32, %arg2: i32) -> (i32, i32, i32) {
    %c1_i32 = arith.constant 1 : i32
    %0 = arith.muli %arg0, %c1_i32 : i32
    %1 = arith.addi %0, %arg2 : i32
    %c0_i32 = arith.constant 0 : i32
    %2 = arith.minsi %1, %c0_i32 : i32
    %c0_i32_0 = arith.constant 0 : i32
    %c0_i32_1 = arith.constant 0 : i32
    return %arg1, %c0_i32_0, %2 : i32, i32, i32
  }
  func.func @transform_1(%arg0: i32, %arg1: i32, %arg2: i32) -> (i32, i32, i32) {
    %c1_i32 = arith.constant 1 : i32
    %0 = arith.muli %arg0, %c1_i32 : i32
    %1 = arith.addi %0, %arg2 : i32
    %c0_i32 = arith.constant 0 : i32
    %2 = arith.minsi %1, %c0_i32 : i32
    %c0_i32_0 = arith.constant 0 : i32
    %c0_i32_1 = arith.constant 0 : i32
    return %arg1, %c0_i32_0, %2 : i32, i32, i32
  }
  func.func @transform_2(%arg0: i32, %arg1: i32, %arg2: i32) -> (i32, i32, i32) {
    %c0_i32 = arith.constant 0 : i32
    %c0_i32_0 = arith.constant 0 : i32
    %c0_i32_1 = arith.constant 0 : i32
    return %arg0, %c0_i32, %c0_i32_0 : i32, i32, i32
  }
  func.func @transform_3(%arg0: i32, %arg1: i32, %arg2: i32) -> (i32, i32, i32) {
    %c0_i32 = arith.constant 0 : i32
    %c0_i32_0 = arith.constant 0 : i32
    %c0_i32_1 = arith.constant 0 : i32
    return %arg0, %c0_i32, %c0_i32_0 : i32, i32, i32
  }
  func.func @transform_4(%arg0: i32, %arg1: i32, %arg2: i32) -> (i32, i32, i32) {
    %c0_i32 = arith.constant 0 : i32
    %c0_i32_0 = arith.constant 0 : i32
    %c0_i32_1 = arith.constant 0 : i32
    return %arg0, %c0_i32, %c0_i32_0 : i32, i32, i32
  }
}

</mosaic_0001>

<llo_original>
// kernel: tpu_custom_call.1
$region0: #{tpu_custom_call.1}
  #allocation0 [shape = 'u32[]', space=smem, size = 0x4, offset = 0x4, fixed_abs, tag = 'smem constant byte address 0x4 - core index']
  #allocation1 [shape = 'u32[72,128]{1,0:T(1,128)}', space=vmem, size = 0x9000, scoped, tag = 'internal scratch']
  %s0 = inlined_call_operand.hbm [shape: f32[2,4,256], index: 0, kind: input, shape index: {}]
  %s1 = inlined_call_operand.hbm [shape: s32[2,1,256], index: 1, kind: input, shape index: {}]
  %s2 = inlined_call_operand.hbm [shape: f32[2,4,128], index: 2, kind: output, shape index: {0}]
  %s3 = inlined_call_operand.hbm [shape: f32[2,4,128], index: 3, kind: output, shape index: {1}]
  %s4 = inlined_call_operand.hbm [shape: f32[2,4,128], index: 4, kind: output, shape index: {2}]
  %5 = xla_tuple %s2, %s3, %s4
  %s6 = sld [smem:[#allocation0]]
  $region69: #{tpu_custom_call.1} parent=0
    _
  %s8 = ssub.s32 1, %s6
  %s9 = scalar_select 0, %s8, %s6
  $region1: #{tpu_custom_call.1} parent=0
    #allocation2 [shape = 'u8[8192]{0}', space=vmem, size = 0x2000, scoped, tag = 'input window, operand 0']
    #allocation3 [shape = 's32[2]{0}', space=sflag, size = 0x8, scoped, tag = 'scoped memory for tpu_custom_call.1']
    #allocation4 [shape = 's32[2]{0}', space=sflag, size = 0x8, scoped, tag = 'scoped memory for tpu_custom_call.1']
    #allocation5 [shape = 'u8[2048]{0}', space=vmem, size = 0x800, scoped, tag = 'input window, operand 1']
    #allocation6 [shape = 's32[2]{0}', space=sflag, size = 0x8, scoped, tag = 'scoped memory for tpu_custom_call.1']
    #allocation7 [shape = 'u8[4096]{0}', space=vmem, size = 0x1000, scoped, tag = 'output window, operand 0']
    #allocation8 [shape = 'u8[4096]{0}', space=vmem, size = 0x1000, scoped, tag = 'output window, operand 1']
    #allocation9 [shape = 's32[2]{0}', space=sflag, size = 0x8, scoped, tag = 'scoped memory for tpu_custom_call.1']
    #allocation10 [shape = 'u8[4096]{0}', space=vmem, size = 0x1000, scoped, tag = 'output window, operand 2']
    %10 = vsyncpa [#allocation3], 0
    %s11 = scalar_lea.sflag [#allocation3], 1
    %12 = vsyncpa %s11, 0
    %13 = vsyncpa [#allocation6], 0
    %s14 = scalar_lea.sflag [#allocation6], 1
    %15 = vsyncpa %s14, 0
    %16 = vsyncpa [#allocation4], 0
    %s17 = scalar_lea.sflag [#allocation4], 1
    %18 = vsyncpa %s17, 0
    %19 = vsyncpa [#allocation9], 0
    %s20 = scalar_lea.sflag [#allocation9], 1
    %21 = vsyncpa %s20, 0
    loop: start=0, step=1, limit=6
    $region2: #{tpu_custom_call.1} parent=1 // loop_pre_header
      _
    $region3: #{tpu_custom_call.1} parent=1 // loop_header
      %s23 = sphi 0, %s27
      %p24 = scmp.ge.s32.totalorder %s23, 6
      %s30 = sphi 0, %s49
      %s31 = sphi 0, %s45
      %s32 = sphi 0, %s41
      %s33 = sphi 0, %s30
      %s34 = sphi 0, %s31
      %s35 = sphi 0, %s32
      %s36 = sphi 0, %s33
      %s37 = sphi 0, %s34
      %s38 = sphi 0, %s35
      %s60 = sphi 0, %s62
      %s63 = sphi 0, %s60
      %s64 = sphi 0, %s63
      %s80 = sphi 0, %s64
      %s94 = sphi 0, %s96
      %s97 = sphi 0, %s94
      %s98 = sphi 0, %s97
      %s114 = sphi 0, %s98
      %s120 = sphi 0, %s122
      %s123 = sphi 0, %s120
      %s124 = sphi 0, %s123
      %s140 = sphi 0, %s124
      %s146 = sphi 0, %s148
      %s149 = sphi 0, %s146
      %s150 = sphi 0, %s149
      %s166 = sphi 0, %s150
      %s172 = sphi 0, %s174
      %s175 = sphi 0, %s172
      %s176 = sphi 0, %s175
      %s192 = sphi 0, %s176
    $region4: #{tpu_custom_call.1} parent=1 // loop_header_branch
      %26 = sbr.rel (%p24) target = $region8
    $region5: #{tpu_custom_call.1} parent=1 // loop_body
      %s28 = ssub.s32 %s23, 1
      %s29 = ssub.s32 %s23, 2
      %s39 = sadd.s32 1, %s32
      %p40 = scmp.ge.s32.totalorder %s39, 1
      %s41 = scalar_select %p40, 0, %s39
      %s42 = sadd.s32 1, %s31
      %s43 = scalar_select %p40, %s42, %s31
      %p44 = scmp.ge.s32.totalorder %s43, 2
      %s45 = scalar_select %p44, 0, %s43
      %s46 = sadd.s32 1, %s30
      %s47 = scalar_select %p44, %s46, %s30
      %p48 = scmp.ge.s32.totalorder %s47, 2
      %s49 = scalar_select %p48, 0, %s47
      %s50 = sadd.s32 %s30, %s32
      %p51 = scmp.lt.s32.totalorder %s50, 0
      %s52 = scalar_select %p51, %s50, 0
      %s53 = sadd.s32 %s49, %s41
      %p54 = scmp.lt.s32.totalorder %s53, 0
      %s55 = scalar_select %p54, %s53, 0
      %s56 = ssub.s32 %s31, %s45
      %s57 = ssub.s32 %s52, %s55
      %s58 = sor.u32 %s56, %s57
      %p59 = scmp.eq.s32.totalorder %s58, 0
      %s61 = sadd.s32 %s60, 1
      %s62 = scalar_select %p59, %s60, %s61
      %p65 = pneg %p59
      %p66 = scmp.eq.s32.totalorder %s23, 3
      %p67 = por %p65, %p66
      %p68 = scmp.ne.s32.totalorder %s60, %s63
      %p69 = scmp.eq.s32.totalorder %s23, 0
      %p70 = por %p68, %p69
      %p71 = scmp.ne.s32.totalorder %s60, %s63
      %p72 = scmp.eq.s32.totalorder %s28, 3
      %p73 = por %p71, %p72
      %p74 = scmp.ne.s32.totalorder %s63, %s64
      %p75 = scmp.eq.s32.totalorder %s28, 0
      %p76 = por %p74, %p75
      %p77 = scmp.ne.s32.totalorder %s63, %s64
      %p78 = scmp.eq.s32.totalorder %s29, 3
      %p79 = por %p77, %p78
      %p81 = scmp.ne.s32.totalorder %s64, %s80
      %p82 = scmp.eq.s32.totalorder %s29, 0
      %p83 = por %p81, %p82
      %s84 = sadd.s32 %s30, %s32
      %p85 = scmp.lt.s32.totalorder %s84, 0
      %s86 = scalar_select %p85, %s84, 0
      %s87 = sadd.s32 %s49, %s41
      %p88 = scmp.lt.s32.totalorder %s87, 0
      %s89 = scalar_select %p88, %s87, 0
      %s90 = ssub.s32 %s31, %s45
      %s91 = ssub.s32 %s86, %s89
      %s92 = sor.u32 %s90, %s91
      %p93 = scmp.eq.s32.totalorder %s92, 0
      %s95 = sadd.s32 %s94, 1
      %s96 = scalar_select %p93, %s94, %s95
      %p99 = pneg %p93
      %p100 = scmp.eq.s32.totalorder %s23, 3
      %p101 = por %p99, %p100
      %p102 = scmp.ne.s32.totalorder %s94, %s97
      %p103 = scmp.eq.s32.totalorder %s23, 0
      %p104 = por %p102, %p103
      %p105 = scmp.ne.s32.totalorder %s94, %s97
      %p106 = scmp.eq.s32.totalorder %s28, 3
      %p107 = por %p105, %p106
      %p108 = scmp.ne.s32.totalorder %s97, %s98
      %p109 = scmp.eq.s32.totalorder %s28, 0
      %p110 = por %p108, %p109
      %p111 = scmp.ne.s32.totalorder %s97, %s98
      %p112 = scmp.eq.s32.totalorder %s29, 3
      %p113 = por %p111, %p112
      %p115 = scmp.ne.s32.totalorder %s98, %s114
      %p116 = scmp.eq.s32.totalorder %s29, 0
      %p117 = por %p115, %p116
      %s118 = ssub.s32 %s30, %s49
      %p119 = scmp.eq.s32.totalorder %s118, 0
      %s121 = sadd.s32 %s120, 1
      %s122 = scalar_select %p119, %s120, %s121
      %p125 = pneg %p119
      %p126 = scmp.eq.s32.totalorder %s23, 3
      %p127 = por %p125, %p126
      %p128 = scmp.ne.s32.totalorder %s120, %s123
      %p129 = scmp.eq.s32.totalorder %s23, 0
      %p130 = por %p128, %p129
      %p131 = scmp.ne.s32.totalorder %s120, %s123
      %p132 = scmp.eq.s32.totalorder %s28, 3
      %p133 = por %p131, %p132
      %p134 = scmp.ne.s32.totalorder %s123, %s124
      %p135 = scmp.eq.s32.totalorder %s28, 0
      %p136 = por %p134, %p135
      %p137 = scmp.ne.s32.totalorder %s123, %s124
      %p138 = scmp.eq.s32.totalorder %s29, 3
      %p139 = por %p137, %p138
      %p141 = scmp.ne.s32.totalorder %s124, %s140
      %p142 = scmp.eq.s32.totalorder %s29, 0
      %p143 = por %p141, %p142
      %s144 = ssub.s32 %s30, %s49
      %p145 = scmp.eq.s32.totalorder %s144, 0
      %s147 = sadd.s32 %s146, 1
      %s148 = scalar_select %p145, %s146, %s147
      %p151 = pneg %p145
      %p152 = scmp.eq.s32.totalorder %s23, 3
      %p153 = por %p151, %p152
      %p154 = scmp.ne.s32.totalorder %s146, %s149
      %p155 = scmp.eq.s32.totalorder %s23, 0
      %p156 = por %p154, %p155
      %p157 = scmp.ne.s32.totalorder %s146, %s149
      %p158 = scmp.eq.s32.totalorder %s28, 3
      %p159 = por %p157, %p158
      %p160 = scmp.ne.s32.totalorder %s149, %s150
      %p161 = scmp.eq.s32.totalorder %s28, 0
      %p162 = por %p160, %p161
      %p163 = scmp.ne.s32.totalorder %s149, %s150
      %p164 = scmp.eq.s32.totalorder %s29, 3
      %p165 = por %p163, %p164
      %p167 = scmp.ne.s32.totalorder %s150, %s166
      %p168 = scmp.eq.s32.totalorder %s29, 0
      %p169 = por %p167, %p168
      %s170 = ssub.s32 %s30, %s49
      %p171 = scmp.eq.s32.totalorder %s170, 0
      %s173 = sadd.s32 %s172, 1
      %s174 = scalar_select %p171, %s172, %s173
      %p177 = pneg %p171
      %p178 = scmp.eq.s32.totalorder %s23, 3
      %p179 = por %p177, %p178
      %p180 = scmp.ne.s32.totalorder %s172, %s175
      %p181 = scmp.eq.s32.totalorder %s23, 0
      %p182 = por %p180, %p181
      %p183 = scmp.ne.s32.totalorder %s172, %s175
      %p184 = scmp.eq.s32.totalorder %s28, 3
      %p185 = por %p183, %p184
      %p186 = scmp.ne.s32.totalorder %s175, %s176
      %p187 = scmp.eq.s32.totalorder %s28, 0
      %p188 = por %p186, %p187
      %p189 = scmp.ne.s32.totalorder %s175, %s176
      %p190 = scmp.eq.s32.totalorder %s29, 3
      %p191 = por %p189, %p190
      %p193 = scmp.ne.s32.totalorder %s176, %s192
      %p194 = scmp.eq.s32.totalorder %s29, 0
      %p195 = por %p193, %p194
      %p196 = scmp.le.s32.totalorder 1, %s23
      %p197 = scmp.lt.s32.totalorder %s23, 5
      %p198 = pnand %p196, %p197
      %p199 = pneg %p198
      // Predicated region
      $region9: #{tpu_custom_call.1} parent=5 // pred_check
        _
      $region10: #{tpu_custom_call.1} parent=5 // pred_check_branch
        %201 = sbr.rel (%p198) target = $region12
      $region11: #{tpu_custom_call.1} parent=5 // pred_region
        %s202 = ssub.s32 %s23, 1
      $region12: #{tpu_custom_call.1} parent=5 // pred_fallthru
        _
      %p203 = scmp.lt.s32.totalorder %s23, 4
      // Predicated region
      $region13: #{tpu_custom_call.1} parent=5 // pred_check
        %p204 = pneg %p203
      $region14: #{tpu_custom_call.1} parent=5 // pred_check_branch
        %206 = sbr.rel (%p204) target = $region16
      $region15: #{tpu_custom_call.1} parent=5 // pred_region
        // Predicated region
        $region17: #{tpu_custom_call.1} parent=15 // pred_check
          %p207 = pneg %p70
        $region18: #{tpu_custom_call.1} parent=15 // pred_check_branch
          %209 = sbr.rel (%p207) target = $region20
        $region19: #{tpu_custom_call.1} parent=15 // pred_region
          %s210 = sand.u32 %s60, 1
          %s211 = scalar_lea.sflag [#allocation3], %s210
          %s212 = sand.u32 %s60, 1
          %s213 = smul.addr %s212, 8
          %s214 = scalar_lea.vmem [#allocation2], %s213
          %s215 = sadd.s32 %s30, %s32
          %p216 = scmp.lt.s32.totalorder %s215, 0
          %s217 = scalar_select %p216, %s215, 0
          %s218 = smul.u32 2, %s217
          %220 = vsyncadd %s211, 0
          %s221 = smul.addr %s31, 2
          %s222 = sadd.s32 %s218, %s221
          %s223 = smul.addr %s222, 4
          %s224 = scalar_lea.hbm %s0, %s223
          %s226 = sshll.u32 %s224, 4
          %s227 = int_to_ptr.hbm [resolvable:$true] %s226
          %s228 = sshll.u32 %s214, 4
          %s229 = int_to_ptr.vmem [resolvable:$true] %s228
          %231 = dma.hbm_to_vmem [thread:$0]  %s227, 128, %s229, %s211
        $region20: #{tpu_custom_call.1} parent=15 // pred_fallthru
          _
        // Predicated region
        $region21: #{tpu_custom_call.1} parent=15 // pred_check
          %p232 = pneg %p104
        $region22: #{tpu_custom_call.1} parent=15 // pred_check_branch
          %234 = sbr.rel (%p232) target = $region24
        $region23: #{tpu_custom_call.1} parent=15 // pred_region
          %s235 = sand.u32 %s94, 1
          %s236 = scalar_lea.sflag [#allocation6], %s235
          %s237 = sand.u32 %s94, 1
          %s238 = smul.addr %s237, 2
          %s239 = scalar_lea.vmem [#allocation5], %s238
          %s240 = sadd.s32 %s30, %s32
          %p241 = scmp.lt.s32.totalorder %s240, 0
          %s242 = scalar_select %p241, %s240, 0
          %s243 = smul.u32 2, %s242
          %245 = vsyncadd %s236, 0
          %s246 = smul.addr %s31, 2
          %s247 = sadd.s32 %s243, %s246
          %s248 = scalar_lea.hbm %s1, %s247
          %s250 = sshll.u32 %s248, 4
          %s251 = int_to_ptr.hbm [resolvable:$true] %s250
          %s252 = sshll.u32 %s239, 4
          %s253 = int_to_ptr.vmem [resolvable:$true] %s252
          %255 = dma.hbm_to_vmem [thread:$0]  %s251, 32, %s253, %s236
        $region24: #{tpu_custom_call.1} parent=15 // pred_fallthru
          _
      $region16: #{tpu_custom_call.1} parent=5 // pred_fallthru
        _
      %p256 = scmp.le.s32.totalorder 1, %s23
      %p257 = scmp.lt.s32.totalorder %s23, 5
      %p258 = pnand %p256, %p257
      %p259 = pneg %p258
      // Predicated region
      $region25: #{tpu_custom_call.1} parent=5 // pred_check
        _
      $region26: #{tpu_custom_call.1} parent=5 // pred_check_branch
        %261 = sbr.rel (%p258) target = $region28
      $region27: #{tpu_custom_call.1} parent=5 // pred_region
        %s262 = ssub.s32 %s23, 1
        %s263 = sand.u32 %s63, 1
        %s264 = scalar_lea.sflag [#allocation3], %s263
        %s265 = sand.u32 %s63, 1
        %s266 = smul.addr %s265, 8
        %s267 = scalar_lea.vmem [#allocation2], %s266
        // Predicated region
        $region29: #{tpu_custom_call.1} parent=27 // pred_check
          %p268 = pneg %p76
        $region30: #{tpu_custom_call.1} parent=27 // pred_check_branch
          %270 = sbr.rel (%p268) target = $region32
        $region31: #{tpu_custom_call.1} parent=27 // pred_region
          %272 = dma.done %s264, 128
        $region32: #{tpu_custom_call.1} parent=27 // pred_fallthru
          _
        %s273 = sand.u32 %s97, 1
        %s274 = scalar_lea.sflag [#allocation6], %s273
        %s275 = sand.u32 %s97, 1
        %s276 = smul.addr %s275, 2
        %s277 = scalar_lea.vmem [#allocation5], %s276
        // Predicated region
        $region33: #{tpu_custom_call.1} parent=27 // pred_check
          %p278 = pneg %p110
        $region34: #{tpu_custom_call.1} parent=27 // pred_check_branch
          %280 = sbr.rel (%p278) target = $region36
        $region35: #{tpu_custom_call.1} parent=27 // pred_region
          %282 = dma.done %s274, 32
        $region36: #{tpu_custom_call.1} parent=27 // pred_fallthru
          _
        %s283 = sand.u32 %s63, 1
        %s284 = scalar_lea.sflag [#allocation3], %s283
        %s285 = sand.u32 %s63, 1
        %s286 = smul.addr %s285, 8
        %s287 = scalar_lea.vmem [#allocation2], %s286
        %p288 = pneg %p76
        %p289 = pneg %p73
        %s290 = sand.u32 %s97, 1
        %s291 = scalar_lea.sflag [#allocation6], %s290
        %s292 = sand.u32 %s97, 1
        %s293 = smul.addr %s292, 2
        %s294 = scalar_lea.vmem [#allocation5], %s293
        %p295 = pneg %p110
        %p296 = pneg %p107
        %p297 = pneg %p136
        %p298 = pneg %p133
        %s299 = sand.u32 %s123, 1
        %s300 = scalar_lea.sflag [#allocation4], %s299
        %s301 = sand.u32 %s123, 1
        %s302 = smul.addr %s301, 4
        %s303 = scalar_lea.vmem [#allocation7], %s302
        %p304 = pneg %p162
        %p305 = pneg %p159
        %s306 = sand.u32 %s28, 1
        %s307 = scalar_lea.sflag [#allocation9], %s306
        %s308 = sand.u32 %s149, 1
        %s309 = smul.addr %s308, 4
        %s310 = scalar_lea.vmem [#allocation8], %s309
        %p311 = pneg %p188
        %p312 = pneg %p185
        %s313 = sand.u32 %s28, 1
        %s314 = scalar_lea.sflag [#allocation9], %s313
        %s315 = sand.u32 %s175, 1
        %s316 = smul.addr %s315, 4
        %s317 = scalar_lea.vmem [#allocation10], %s316
        %s318 = sadd.s32 %s33, %s35
        %p319 = scmp.lt.s32.totalorder %s318, 0
        %s320 = scalar_select %p319, %s318, 0
        %s321 = smul.u32 2, %s320
        %s322 = sadd.s32 %s33, %s35
        %p323 = scmp.lt.s32.totalorder %s322, 0
        %s324 = scalar_select %p323, %s322, 0
        %s325 = smul.u32 2, %s324
        %p326 = scmp.eq.s32.totalorder %s34, 0
        %p327 = scmp.eq.s32.totalorder %s35, 0
        %p328 = pnand %p326, %p327
        %p329 = pneg %p328
        // Predicated region
        $region37: #{tpu_custom_call.1} parent=27 // pred_check
          _
        $region38: #{tpu_custom_call.1} parent=27 // pred_check_branch
          %331 = sbr.rel (%p328) target = $region40
        $region39: #{tpu_custom_call.1} parent=27 // pred_region
          %332 = vst [vmem:[%s303] sm:$0xf] 0.0
          %333 = vst [vmem:[%s310] sm:$0xf] 0.0
          %334 = vst [vmem:[%s317] sm:$0xf] 0.0
        $region40: #{tpu_custom_call.1} parent=27 // pred_fallthru
          _
        %v335 = vld [vmem:[%s267] sm:$0xff]
        %v336 = vld [vmem:[%s277] sm:$0x3]
        %s337 = sadd.s32 %s33, %s35
        %v338 = vlaneseq
        %v339 = vand.u32 %v338, 127
        %v340 = vadd.s32 %v339, 128
        %s341 = smul.u32 %s337, 256
        %v342 = vstv %s341
        %v343 = vadd.s32 %v342, %v339
        %v344 = vadd.s32 %v342, %v340
        %vm345 = vcmp.lt.s32.totalorder %v343, 256
        %vm346 = vcmp.lt.s32.totalorder %v344, 256
        %vm347 = vcmp.ne.s32.totalorder %v336, 255
        %v348 = vsel %vm347, 1, 0
        %v349 = vperm.slane %v348, 0
        %v350 = vperm.slane %v348, 1
        %vm351 = vcmp.ne.s32.totalorder %v349, 0
        %vm352 = vcmp.ne.s32.totalorder %v350, 0
        %vm353 = vmand %vm345, %vm351
        %vm354 = vmand %vm346, %vm352
        %v355 = vsel %vm345, 1, 0
        %v356 = vsel %vm346, 1, 0
        %vm357 = vcmp.eq.s32.totalorder %v355, 1
        %vm358 = vcmp.eq.s32.totalorder %v356, 1
        %360 = vst [vmem:[#allocation1] ss:$2 sm:$0xff] %v335
        %v361 = vld.sshfl [vmem:[#allocation1] sm:$0xff pattern:$0x75316420]
        %v362 = vld.sshfl [vmem:[#allocation1 + $0x8] sm:$0xff pattern:$0x75316420]
        %v365 = vsel %vm357, %v361, 0.0
        %v366 = vsel %vm358, %v362, 0.0
        %v367 = vsel %vm353, 1, 0
        %v368 = vsel %vm354, 1, 0
        %v369 = vcvt.s32.f32 %v367
        %v370 = vcvt.s32.f32 %v368
        %vm371 = vcmask 1043456
        %v372 = vsel %vm371, %v365, -inf
        %v373 = vrot.slane %v372, 4
        %v374 = vmax.f32 %v372, %v373
        %v375 = vrot.slane %v374, 2
        %v376 = vmax.f32 %v374, %v375
        %v377 = vrot.slane %v376, 1
        %v378 = vmax.f32 %v376, %v377
        %v379 = vsel %vm371, %v366, -inf
        %v380 = vrot.slane %v379, 4
        %v381 = vmax.f32 %v379, %v380
        %v382 = vrot.slane %v381, 2
        %v383 = vmax.f32 %v381, %v382
        %v384 = vrot.slane %v383, 1
        %v385 = vmax.f32 %v383, %v384
        %v386 = vsub.f32 %v365, %v378
        %v387 = vsub.f32 %v366, %v385
        %v388 = vmul.f32 %v386, 1.442695
        %v389 = vpow.pop %v388
        %v390 = vmul.f32 %v387, 1.442695
        %v391 = vpow.pop %v390
        %v392 = vsel %vm371, %v389, 0.0
        %v393 = vrot.slane %v392, 4
        %v394 = vadd.f32 %v392, %v393
        %v395 = vrot.slane %v394, 2
        %v396 = vadd.f32 %v394, %v395
        %v397 = vrot.slane %v396, 1
        %v398 = vadd.f32 %v396, %v397
        %v399 = vsel %vm371, %v391, 0.0
        %v400 = vrot.slane %v399, 4
        %v401 = vadd.f32 %v399, %v400
        %v402 = vrot.slane %v401, 2
        %v403 = vadd.f32 %v401, %v402
        %v404 = vrot.slane %v403, 1
        %v405 = vadd.f32 %v403, %v404
        %v406 = vrcp.pop %v398
        %v407 = vmul.f32 %v398, %v406
        %v408 = vsub.f32 1.0, %v407
        %v409 = vmul.f32 %v406, %v408
        %v410 = vadd.f32 %v406, %v409
        %vm411 = vweird.f32 %v398
        %vm412 = vweird.f32 %v406
        %vm413 = vmor %vm411, %vm412
        %v414 = vsel %vm413, %v406, %v410
        %v415 = vand.u32 2147483647, %v398
        %vm416 = vcmp.eq.f32.partialorder %v415, 8.507059e+37
        %v417 = vand.u32 %v398, 2147483648
        %v418 = vor.u32 1.1754944e-38, %v417
        %v419 = vsel %vm416, %v418, %v414
        %v420 = vrcp.pop %v405
        %v421 = vmul.f32 %v405, %v420
        %v422 = vsub.f32 1.0, %v421
        %v423 = vmul.f32 %v420, %v422
        %v424 = vadd.f32 %v420, %v423
        %vm425 = vweird.f32 %v405
        %vm426 = vweird.f32 %v420
        %vm427 = vmor %vm425, %vm426
        %v428 = vsel %vm427, %v420, %v424
        %v429 = vand.u32 2147483647, %v405
        %vm430 = vcmp.eq.f32.partialorder %v429, 8.507059e+37
        %v431 = vand.u32 %v405, 2147483648
        %v432 = vor.u32 1.1754944e-38, %v431
        %v433 = vsel %vm430, %v432, %v428
        %v434 = vmul.f32 %v419, %v369
        %v435 = vmul.f32 %v433, %v370
        %v436 = vperm.slane %v434, 0
        %v437 = vperm.slane %v435, 0
        %v438 = vmul.f32 %v389, %v436
        %v439 = vmul.f32 %v391, %v437
        %v440 = vlaneseq
        %v441 = vshrl.u32 %v440, 7
        %v442 = vperm.slane %v336, 0
        %v443 = vperm.slane %v336, 1
        %vm444 = vcmp.eq.s32.totalorder %v442, %v441
        %vm445 = vcmp.eq.s32.totalorder %v443, %v441
        %v446 = vld [vmem:[%s303] sm:$0xf]
        %v447 = vsel %vm444, %v438, 0.0
        %v448 = vsel %vm445, %v439, 0.0
        %v449 = vadd.f32 %v447, %v448
        %v450 = vadd.f32 %v446, %v449
        %451 = vst [vmem:[%s303] sm:$0xf] %v450
        %v452 = vld [vmem:[%s310] sm:$0xf]
        %v453 = vadd.f32 %v438, %v439
        %v454 = vadd.f32 %v452, %v453
        %455 = vst [vmem:[%s310] sm:$0xf] %v454
        %v456 = vld [vmem:[%s317] sm:$0xf]
        %v457 = vperm.slane %v369, 0
        %v458 = vperm.slane %v370, 0
        %v459 = vsel %vm444, %v457, 0.0
        %v460 = vsel %vm445, %v458, 0.0
        %v461 = vadd.f32 %v459, %v460
        %v462 = vadd.f32 %v456, %v461
        %463 = vst [vmem:[%s317] sm:$0xf] %v462
        %s464 = sand.u32 %s123, 1
        %s465 = scalar_lea.sflag [#allocation4], %s464
        %s466 = sand.u32 %s123, 1
        %s467 = smul.addr %s466, 4
        %s468 = scalar_lea.vmem [#allocation7], %s467
        %s469 = sand.u32 %s28, 1
        %s470 = scalar_lea.sflag [#allocation9], %s469
        %s471 = sand.u32 %s149, 1
        %s472 = smul.addr %s471, 4
        %s473 = scalar_lea.vmem [#allocation8], %s472
        %s474 = sand.u32 %s28, 1
        %s475 = scalar_lea.sflag [#allocation9], %s474
        %s476 = sand.u32 %s175, 1
        %s477 = smul.addr %s476, 4
        %s478 = scalar_lea.vmem [#allocation10], %s477
        // Predicated region
        $region41: #{tpu_custom_call.1} parent=27 // pred_check
          %p479 = pneg %p133
        $region42: #{tpu_custom_call.1} parent=27 // pred_check_branch
          %481 = sbr.rel (%p479) target = $region44
        $region43: #{tpu_custom_call.1} parent=27 // pred_region
          %483 = vsyncadd %s465, 0
          %s484 = smul.addr %s33, 4
          %s485 = scalar_lea.hbm %s2, %s484
          %s487 = sshll.u32 %s468, 4
          %s488 = int_to_ptr.vmem [resolvable:$true] %s487
          %s489 = sshll.u32 %s485, 4
          %s490 = int_to_ptr.hbm [resolvable:$true] %s489
          %492 = dma.vmem_to_hbm [thread:$0]  %s488, 64, %s490, %s465
        $region44: #{tpu_custom_call.1} parent=27 // pred_fallthru
          _
        // Predicated region
        $region45: #{tpu_custom_call.1} parent=27 // pred_check
          %p493 = pneg %p159
        $region46: #{tpu_custom_call.1} parent=27 // pred_check_branch
          %495 = sbr.rel (%p493) target = $region48
        $region47: #{tpu_custom_call.1} parent=27 // pred_region
          %497 = vsyncadd %s470, 0
          %s498 = smul.addr %s33, 4
          %s499 = scalar_lea.hbm %s3, %s498
          %s501 = sshll.u32 %s473, 4
          %s502 = int_to_ptr.vmem [resolvable:$true] %s501
          %s503 = sshll.u32 %s499, 4
          %s504 = int_to_ptr.hbm [resolvable:$true] %s503
          %506 = dma.vmem_to_hbm [thread:$0]  %s502, 64, %s504, %s470
        $region48: #{tpu_custom_call.1} parent=27 // pred_fallthru
          _
        // Predicated region
        $region49: #{tpu_custom_call.1} parent=27 // pred_check
          %p507 = pneg %p185
        $region50: #{tpu_custom_call.1} parent=27 // pred_check_branch
          %509 = sbr.rel (%p507) target = $region52
        $region51: #{tpu_custom_call.1} parent=27 // pred_region
          %511 = vsyncadd %s475, 0
          %s512 = smul.addr %s33, 4
          %s513 = scalar_lea.hbm %s4, %s512
          %s515 = sshll.u32 %s478, 4
          %s516 = int_to_ptr.vmem [resolvable:$true] %s515
          %s517 = sshll.u32 %s513, 4
          %s518 = int_to_ptr.hbm [resolvable:$true] %s517
          %520 = dma.vmem_to_hbm [thread:$0]  %s516, 64, %s518, %s475
        $region52: #{tpu_custom_call.1} parent=27 // pred_fallthru
          _
      $region28: #{tpu_custom_call.1} parent=5 // pred_fallthru
        _
      %p521 = scmp.le.s32.totalorder 2, %s23
      // Predicated region
      $region53: #{tpu_custom_call.1} parent=5 // pred_check
        %p522 = pneg %p521
      $region54: #{tpu_custom_call.1} parent=5 // pred_check_branch
        %524 = sbr.rel (%p522) target = $region56
      $region55: #{tpu_custom_call.1} parent=5 // pred_region
        %s525 = ssub.s32 %s23, 2
        // Predicated region
        $region57: #{tpu_custom_call.1} parent=55 // pred_check
          %p526 = pneg %p139
        $region58: #{tpu_custom_call.1} parent=55 // pred_check_branch
          %528 = sbr.rel (%p526) target = $region60
        $region59: #{tpu_custom_call.1} parent=55 // pred_region
          %s529 = sand.u32 %s124, 1
          %s530 = scalar_lea.sflag [#allocation4], %s529
          %s531 = sand.u32 %s124, 1
          %s532 = smul.addr %s531, 4
          %s533 = scalar_lea.vmem [#allocation7], %s532
          %535 = dma.done %s530, 64
        $region60: #{tpu_custom_call.1} parent=55 // pred_fallthru
          _
        // Predicated region
        $region61: #{tpu_custom_call.1} parent=55 // pred_check
          %p536 = pneg %p165
        $region62: #{tpu_custom_call.1} parent=55 // pred_check_branch
          %538 = sbr.rel (%p536) target = $region64
        $region63: #{tpu_custom_call.1} parent=55 // pred_region
          %s539 = sand.u32 %s29, 1
          %s540 = scalar_lea.sflag [#allocation9], %s539
          %s541 = sand.u32 %s150, 1
          %s542 = smul.addr %s541, 4
          %s543 = scalar_lea.vmem [#allocation8], %s542
          %545 = dma.done %s540, 64
        $region64: #{tpu_custom_call.1} parent=55 // pred_fallthru
          _
        // Predicated region
        $region65: #{tpu_custom_call.1} parent=55 // pred_check
          %p546 = pneg %p191
        $region66: #{tpu_custom_call.1} parent=55 // pred_check_branch
          %548 = sbr.rel (%p546) target = $region68
        $region67: #{tpu_custom_call.1} parent=55 // pred_region
          %s549 = sand.u32 %s29, 1
          %s550 = scalar_lea.sflag [#allocation9], %s549
          %s551 = sand.u32 %s176, 1
          %s552 = smul.addr %s551, 4
          %s553 = scalar_lea.vmem [#allocation10], %s552
          %555 = dma.done %s550, 64
        $region68: #{tpu_custom_call.1} parent=55 // pred_fallthru
          _
      $region56: #{tpu_custom_call.1} parent=5 // pred_fallthru
        _
    $region6: #{tpu_custom_call.1} parent=1 // loop_footer
      %s27 = sadd.s32 1, %s23
    $region7: #{tpu_custom_call.1} parent=1 // loop_footer_branch
      %22 = sbr.rel target = $region3
    $region8: #{tpu_custom_call.1} parent=1 // loop_exit
      _
    %556 = vsyncpa [#allocation3], 1
    %s557 = scalar_lea.sflag [#allocation3], 1
    %558 = vsyncpa %s557, 1
    %559 = vsyncpa [#allocation6], 1
    %s560 = scalar_lea.sflag [#allocation6], 1
    %561 = vsyncpa %s560, 1
    %562 = vsyncpa [#allocation4], 1
    %s563 = scalar_lea.sflag [#allocation4], 1
    %564 = vsyncpa %s563, 1
    %565 = vsyncpa [#allocation9], 1
    %s566 = scalar_lea.sflag [#allocation9], 1
    %567 = vsyncpa %s566, 1

</llo_original>
